<compile_context>
chip_gen: v7x
topology: tpu7x:2x2x1
jax: 0.10.0
libtpu: 0.0.40
codegen_flags: <defaults>
</compile_context>

<pallas_src>
import functools

import jax
import jax.numpy as jnp
from jax import lax
from jax.experimental import pallas as pl
from jax.experimental.pallas import tpu as pltpu

LN_EPS = 1e-5  # nn.LayerNorm default eps (module's self.eps=1e-6 is unused in forward)


# ----------------------------- kernel ---------------------------------------

def _layernorm(y, g, b, eps):
    mu = jnp.mean(y, axis=-1, keepdims=True)
    c = y - mu
    var = jnp.mean(c * c, axis=-1, keepdims=True)
    return c * lax.rsqrt(var + eps) * g + b


def _fused_kernel(meta_ref, xq_ref, w_meta_ref, w_img_ref, vec_ref,
                  cent_ref, emb_ref, *prob_refs, eps):
    # Per-batch-element fused forward.  Grid axis 0 == bs ("parallel").
    # x @ W.T with W in PyTorch [N, K] layout: contract dim 1 of both operands
    # (MXU handles the transposed contraction natively).
    dn = (((1,), (1,)), ((), ()))

    vec = vec_ref[...].astype(jnp.float32)         # (4, N): [b_meta, b_img, gamma, beta]
    b_meta = vec[0:1, :]
    b_img = vec[1:2, :]
    gamma = vec[2:3, :]
    beta = vec[3:4, :]

    # --- linear_meta + LayerNorm -> centroids (C, N) ---
    meta = meta_ref[0].astype(jnp.float32)                           # (C, Fm)
    cent = lax.dot_general(meta, w_meta_ref[...].astype(jnp.float32), dn,
                           preferred_element_type=jnp.float32) + b_meta
    cent = _layernorm(cent, gamma, beta, eps)
    cent_ref[0] = cent.astype(cent_ref.dtype)

    # --- linear_img + LayerNorm -> query embeddings (Q, N) ---
    xq = xq_ref[0].astype(jnp.float32)                               # (Q, Fi)
    emb = lax.dot_general(xq, w_img_ref[...].astype(jnp.float32), dn,
                          preferred_element_type=jnp.float32) + b_img
    emb = _layernorm(emb, gamma, beta, eps)
    emb_ref[0] = emb.astype(emb_ref.dtype)

    if prob_refs:  # static Python flag (traced once)
        (prob_ref,) = prob_refs
        # Squared-euclidean via MXU: dist = ||c||^2 + ||q||^2 - 2 c.q.
        # ||q||^2 is constant per query column and cancels in the softmax over
        # classes, so it is dropped from the logits entirely.
        cross = lax.dot_general(cent, emb, dn,
                                preferred_element_type=jnp.float32)   # (C, Q)
        c_sq = jnp.sum(cent * cent, axis=-1, keepdims=True)           # (C, 1)
        logits = 2.0 * cross - c_sq                                   # = -dist + ||q||^2
        m = jnp.max(logits, axis=0, keepdims=True)
        e = jnp.exp(logits - m)
        denom = jnp.sum(e, axis=0, keepdims=True)
        prob_ref[0] = (e * pl.reciprocal(denom, approx=True)).astype(prob_ref.dtype)


# ----------------------------- wrapper --------------------------------------

def prototypical_zero_shot_forward(params, meta_classes, X_query, get_probabilities=True):
    bs, C, Fm = meta_classes.shape
    _, Q, Fi = X_query.shape
    N = params["w_img"].shape[0]
    dt = X_query.dtype

    # Stack the four length-N parameter vectors into one (4, N) tile: a single
    # DMA and a single (8,128)-padded VMEM buffer instead of four.
    vecs = jnp.stack(
        [params["b_meta"], params["b_img"], params["ln_g"], params["ln_b"]], axis=0)

    const2d = lambda b: (0, 0)
    in_specs = [
        pl.BlockSpec((1, C, Fm), lambda b: (b, 0, 0)),   # meta_classes
        pl.BlockSpec((1, Q, Fi), lambda b: (b, 0, 0)),   # X_query
        pl.BlockSpec((N, Fm), const2d),                  # w_meta [N, K] (PyTorch layout)
        pl.BlockSpec((N, Fi), const2d),                  # w_img  [N, K]
        pl.BlockSpec((4, N), const2d),                   # [b_meta; b_img; gamma; beta]
    ]
    out_shapes = [
        jax.ShapeDtypeStruct((bs, C, N), dt),            # centroids
        jax.ShapeDtypeStruct((bs, Q, N), dt),            # embeddings_query
    ]
    out_specs = [
        pl.BlockSpec((1, C, N), lambda b: (b, 0, 0)),
        pl.BlockSpec((1, Q, N), lambda b: (b, 0, 0)),
    ]
    if get_probabilities:
        # TODO(synk): at production query sizes, pad Q to a multiple of 128 for
        # lane-dense stores of prob_query and slice back in the wrapper.
        out_shapes.append(jax.ShapeDtypeStruct((bs, C, Q), dt))
        out_specs.append(pl.BlockSpec((1, C, Q), lambda b: (b, 0, 0)))

    outs = pl.pallas_call(
        functools.partial(_fused_kernel, eps=LN_EPS),
        out_shape=tuple(out_shapes),
        grid=(bs,),
        in_specs=in_specs,
        out_specs=tuple(out_specs),
        compiler_params=pltpu.CompilerParams(
            dimension_semantics=("parallel",),
            # Explicit budget; per-batch tiles stay small even at production
            # C/Q/F, and 32 MiB leaves headroom on v5e/v6e (128 MiB) and v7x (64 MiB).
            vmem_limit_bytes=32 * 1024 * 1024,
        ),
    )(meta_classes, X_query, params["w_meta"], params["w_img"], vecs)

    result = dict(centroids=outs[0], embeddings_query=outs[1])
    if get_probabilities:
        # TODO(synk): distance_function is injected in PyTorch; squared-euclidean assumed here.
        result["prob_query"] = outs[2]
    return result


# ----------------------------- reference ------------------------------------

def _ref_forward(params, meta_classes, X_query):
    hp = lax.Precision.HIGHEST

    def lin_ln(x, w, b):
        y = jnp.einsum("...k,nk->...n", x, w, precision=hp) + b
        mu = jnp.mean(y, axis=-1, keepdims=True)
        var = jnp.mean((y - mu) ** 2, axis=-1, keepdims=True)
        return (y - mu) / jnp.sqrt(var + LN_EPS) * params["ln_g"] + params["ln_b"]

    cent = lin_ln(meta_classes, params["w_meta"], params["b_meta"])
    q = lin_ln(X_query, params["w_img"], params["b_img"])
    # diff-based distance: independent check of the matmul reformulation.
    dist = jnp.sum((cent[:, :, None, :] - q[:, None, :, :]) ** 2, axis=-1)  # [bs, C, Q]
    logp = -dist
    lse = jax.nn.logsumexp(logp, axis=1, keepdims=True)
    return cent, q, jnp.exp(logp - lse)


# ----------------------------- main -----------------------------------------

if __name__ == "__main__":
    bs, num_classes, query_size = 2, 4, 8
    meta_features, img_features = 32, 128

    key = jax.random.PRNGKey(0)
    ks = jax.random.split(key, 8)

    def uinit(k, shape, fan_in):
        bound = 1.0 / jnp.sqrt(float(fan_in))
        return jax.random.uniform(k, shape, jnp.float32, -bound, bound)

    params = dict(
        w_meta=uinit(ks[0], (img_features, meta_features), meta_features),
        b_meta=uinit(ks[1], (img_features,), meta_features),
        w_img=uinit(ks[2], (img_features, img_features), img_features),
        b_img=uinit(ks[3], (img_features,), img_features),
        ln_g=jnp.ones((img_features,), jnp.float32),
        ln_b=jnp.zeros((img_features,), jnp.float32),
    )

    meta_classes = jax.random.normal(ks[4], (bs, num_classes, meta_features), jnp.float32)
    X_query = jax.random.normal(ks[5], (bs, query_size, img_features), jnp.float32)

    out = prototypical_zero_shot_forward(params, meta_classes, X_query, get_probabilities=True)
    jax.block_until_ready(out)

    cent_ref, q_ref, prob_ref = _ref_forward(params, meta_classes, X_query)
    assert jnp.allclose(out["centroids"], cent_ref, atol=1e-4, rtol=1e-4)
    assert jnp.allclose(out["embeddings_query"], q_ref, atol=1e-4, rtol=1e-4)
    # matmul-form distance + approx reciprocal vs diff-based reference: slightly
    # relaxed tolerance (probabilities are in [0, 1]).
    assert jnp.allclose(out["prob_query"], prob_ref, atol=5e-3, rtol=5e-3)

    print("KERNEL_OK")
</pallas_src>

<mosaic_0001>
module attributes {stable_mosaic.version = 11 : i64} {
  func.func @_fused_kernel(%arg0: i32, %arg1: memref<1x4x32xf32, #tpu.memory_space<vmem>>, %arg2: memref<1x8x128xf32, #tpu.memory_space<vmem>>, %arg3: memref<128x32xf32, #tpu.memory_space<vmem>>, %arg4: memref<128x128xf32, #tpu.memory_space<vmem>>, %arg5: memref<4x128xf32, #tpu.memory_space<vmem>>, %arg6: memref<1x4x128xf32, #tpu.memory_space<vmem>>, %arg7: memref<1x8x128xf32, #tpu.memory_space<vmem>>, %arg8: memref<1x4x8xf32, #tpu.memory_space<vmem>>) attributes {dimension_semantics = [#tpu.dimension_semantics<parallel>], iteration_bounds = array<i64: 2>, scalar_prefetch = 0 : i64, scratch_operands = 0 : i64, tpu.core_type = #tpu.core_type<tc>, window_params = [{transform_indices = @transform_0, window_bounds = array<i64: 1, 4, 32>}, {transform_indices = @transform_1, window_bounds = array<i64: 1, 8, 128>}, {pipeline_mode = #tpu.pipeline_mode<synchronous>, transform_indices = @transform_2, window_bounds = array<i64: 128, 32>}, {pipeline_mode = #tpu.pipeline_mode<synchronous>, transform_indices = @transform_3, window_bounds = array<i64: 128, 128>}, {pipeline_mode = #tpu.pipeline_mode<synchronous>, transform_indices = @transform_4, window_bounds = array<i64: 4, 128>}, {transform_indices = @transform_5, window_bounds = array<i64: 1, 4, 128>}, {transform_indices = @transform_6, window_bounds = array<i64: 1, 8, 128>}, {transform_indices = @transform_7, window_bounds = array<i64: 1, 4, 8>}]} {
    %c0 = arith.constant 0 : index
    %c0_0 = arith.constant 0 : index
    %0 = vector.load %arg5[%c0, %c0_0] : memref<4x128xf32, #tpu.memory_space<vmem>>, vector<4x128xf32>
    %1 = vector.extract_strided_slice %0 {offsets = [0, 0], sizes = [1, 128], strides = [1, 1]} : vector<4x128xf32> to vector<1x128xf32>
    %2 = vector.extract_strided_slice %0 {offsets = [1, 0], sizes = [1, 128], strides = [1, 1]} : vector<4x128xf32> to vector<1x128xf32>
    %3 = vector.extract_strided_slice %0 {offsets = [2, 0], sizes = [1, 128], strides = [1, 1]} : vector<4x128xf32> to vector<1x128xf32>
    %4 = vector.extract_strided_slice %0 {offsets = [3, 0], sizes = [1, 128], strides = [1, 1]} : vector<4x128xf32> to vector<1x128xf32>
    %c0_1 = arith.constant 0 : index
    %c0_2 = arith.constant 0 : index
    %c0_3 = arith.constant 0 : index
    %5 = vector.load %arg1[%c0_1, %c0_2, %c0_3] : memref<1x4x32xf32, #tpu.memory_space<vmem>>, vector<1x4x32xf32>
    %6 = vector.shape_cast %5 : vector<1x4x32xf32> to vector<4x32xf32>
    %c0_4 = arith.constant 0 : index
    %c0_5 = arith.constant 0 : index
    %7 = vector.load %arg3[%c0_4, %c0_5] : memref<128x32xf32, #tpu.memory_space<vmem>>, vector<128x32xf32>
    %cst = arith.constant dense<0.000000e+00> : vector<4x128xf32>
    %8 = tpu.matmul %6, %7, %cst {dimension_numbers = #tpu.dot_dimension_numbers<[1], [1], [0], [0], [0, 0, 1, 0], [], []>} : vector<4x32xf32>, vector<128x32xf32>, vector<4x128xf32> -> vector<4x128xf32>
    %9 = vector.broadcast %1 : vector<1x128xf32> to vector<4x128xf32>
    %10 = arith.addf %8, %9 : vector<4x128xf32>
    %cst_6 = arith.constant dense<0.000000e+00> : vector<4xf32>
    %11 = vector.multi_reduction <add>, %10, %cst_6 [1] : vector<4x128xf32> to vector<4xf32>
    %12 = vector.shape_cast %11 : vector<4xf32> to vector<4x1xf32>
    %cst_7 = arith.constant 1.280000e+02 : f32
    %13 = vector.broadcast %cst_7 : f32 to vector<4x1xf32>
    %14 = arith.divf %12, %13 : vector<4x1xf32>
    %15 = vector.broadcast %14 : vector<4x1xf32> to vector<4x128xf32>
    %16 = arith.subf %10, %15 : vector<4x128xf32>
    %17 = arith.mulf %16, %16 : vector<4x128xf32>
    %cst_8 = arith.constant dense<0.000000e+00> : vector<4xf32>
    %18 = vector.multi_reduction <add>, %17, %cst_8 [1] : vector<4x128xf32> to vector<4xf32>
    %19 = vector.shape_cast %18 : vector<4xf32> to vector<4x1xf32>
    %cst_9 = arith.constant 1.280000e+02 : f32
    %20 = vector.broadcast %cst_9 : f32 to vector<4x1xf32>
    %21 = arith.divf %19, %20 : vector<4x1xf32>
    %cst_10 = arith.constant 9.99999974E-6 : f32
    %22 = vector.broadcast %cst_10 : f32 to vector<4x1xf32>
    %23 = arith.addf %21, %22 : vector<4x1xf32>
    %24 = math.rsqrt %23 : vector<4x1xf32>
    %25 = vector.broadcast %24 : vector<4x1xf32> to vector<4x128xf32>
    %26 = arith.mulf %16, %25 : vector<4x128xf32>
    %27 = vector.broadcast %3 : vector<1x128xf32> to vector<4x128xf32>
    %28 = arith.mulf %26, %27 : vector<4x128xf32>
    %29 = vector.broadcast %4 : vector<1x128xf32> to vector<4x128xf32>
    %30 = arith.addf %28, %29 : vector<4x128xf32>
    %c0_11 = arith.constant 0 : index
    %c0_12 = arith.constant 0 : index
    %c0_13 = arith.constant 0 : index
    %31 = vector.load %arg6[%c0_11, %c0_12, %c0_13] : memref<1x4x128xf32, #tpu.memory_space<vmem>>, vector<1x4x128xf32>
    %32 = vector.shape_cast %31 : vector<1x4x128xf32> to vector<4x128xf32>
    %33 = vector.shape_cast %30 : vector<4x128xf32> to vector<1x4x128xf32>
    tpu.vector_store %arg6[%c0_11, %c0_12, %c0_13], %33 {strides = array<i32>} : memref<1x4x128xf32, #tpu.memory_space<vmem>>, vector<1x4x128xf32>,
    %c0_14 = arith.constant 0 : index
    %c0_15 = arith.constant 0 : index
    %c0_16 = arith.constant 0 : index
    %34 = vector.load %arg2[%c0_14, %c0_15, %c0_16] : memref<1x8x128xf32, #tpu.memory_space<vmem>>, vector<1x8x128xf32>
    %35 = vector.shape_cast %34 : vector<1x8x128xf32> to vector<8x128xf32>
    %c0_17 = arith.constant 0 : index
    %c0_18 = arith.constant 0 : index
    %36 = vector.load %arg4[%c0_17, %c0_18] : memref<128x128xf32, #tpu.memory_space<vmem>>, vector<128x128xf32>
    %cst_19 = arith.constant dense<0.000000e+00> : vector<8x128xf32>
    %37 = tpu.matmul %35, %36, %cst_19 {dimension_numbers = #tpu.dot_dimension_numbers<[1], [1], [0], [0], [0, 0, 1, 0], [], []>} : vector<8x128xf32>, vector<128x128xf32>, vector<8x128xf32> -> vector<8x128xf32>
    %38 = vector.broadcast %2 : vector<1x128xf32> to vector<8x128xf32>
    %39 = arith.addf %37, %38 : vector<8x128xf32>
    %cst_20 = arith.constant dense<0.000000e+00> : vector<8xf32>
    %40 = vector.multi_reduction <add>, %39, %cst_20 [1] : vector<8x128xf32> to vector<8xf32>
    %41 = vector.shape_cast %40 : vector<8xf32> to vector<8x1xf32>
    %cst_21 = arith.constant 1.280000e+02 : f32
    %42 = vector.broadcast %cst_21 : f32 to vector<8x1xf32>
    %43 = arith.divf %41, %42 : vector<8x1xf32>
    %44 = vector.broadcast %43 : vector<8x1xf32> to vector<8x128xf32>
    %45 = arith.subf %39, %44 : vector<8x128xf32>
    %46 = arith.mulf %45, %45 : vector<8x128xf32>
    %cst_22 = arith.constant dense<0.000000e+00> : vector<8xf32>
    %47 = vector.multi_reduction <add>, %46, %cst_22 [1] : vector<8x128xf32> to vector<8xf32>
    %48 = vector.shape_cast %47 : vector<8xf32> to vector<8x1xf32>
    %cst_23 = arith.constant 1.280000e+02 : f32
    %49 = vector.broadcast %cst_23 : f32 to vector<8x1xf32>
    %50 = arith.divf %48, %49 : vector<8x1xf32>
    %cst_24 = arith.constant 9.99999974E-6 : f32
    %51 = vector.broadcast %cst_24 : f32 to vector<8x1xf32>
    %52 = arith.addf %50, %51 : vector<8x1xf32>
    %53 = math.rsqrt %52 : vector<8x1xf32>
    %54 = vector.broadcast %53 : vector<8x1xf32> to vector<8x128xf32>
    %55 = arith.mulf %45, %54 : vector<8x128xf32>
    %56 = vector.broadcast %3 : vector<1x128xf32> to vector<8x128xf32>
    %57 = arith.mulf %55, %56 : vector<8x128xf32>
    %58 = vector.broadcast %4 : vector<1x128xf32> to vector<8x128xf32>
    %59 = arith.addf %57, %58 : vector<8x128xf32>
    %c0_25 = arith.constant 0 : index
    %c0_26 = arith.constant 0 : index
    %c0_27 = arith.constant 0 : index
    %60 = vector.load %arg7[%c0_25, %c0_26, %c0_27] : memref<1x8x128xf32, #tpu.memory_space<vmem>>, vector<1x8x128xf32>
    %61 = vector.shape_cast %60 : vector<1x8x128xf32> to vector<8x128xf32>
    %62 = vector.shape_cast %59 : vector<8x128xf32> to vector<1x8x128xf32>
    tpu.vector_store %arg7[%c0_25, %c0_26, %c0_27], %62 {strides = array<i32>} : memref<1x8x128xf32, #tpu.memory_space<vmem>>, vector<1x8x128xf32>,
    %cst_28 = arith.constant dense<0.000000e+00> : vector<4x8xf32>
    %63 = tpu.matmul %30, %59, %cst_28 {dimension_numbers = #tpu.dot_dimension_numbers<[1], [1], [0], [0], [0, 0, 1, 0], [], []>} : vector<4x128xf32>, vector<8x128xf32>, vector<4x8xf32> -> vector<4x8xf32>
    %64 = arith.mulf %30, %30 : vector<4x128xf32>
    %cst_29 = arith.constant dense<0.000000e+00> : vector<4xf32>
    %65 = vector.multi_reduction <add>, %64, %cst_29 [1] : vector<4x128xf32> to vector<4xf32>
    %66 = vector.shape_cast %65 : vector<4xf32> to vector<4x1xf32>
    %cst_30 = arith.constant 2.000000e+00 : f32
    %67 = vector.broadcast %cst_30 : f32 to vector<4x8xf32>
    %68 = arith.mulf %67, %63 : vector<4x8xf32>
    %69 = vector.broadcast %66 : vector<4x1xf32> to vector<4x8xf32>
    %70 = arith.subf %68, %69 : vector<4x8xf32>
    %cst_31 = arith.constant dense<0xFF800000> : vector<8xf32>
    %71 = vector.multi_reduction <maximumf>, %70, %cst_31 [0] : vector<4x8xf32> to vector<8xf32>
    %72 = vector.shape_cast %71 : vector<8xf32> to vector<1x8xf32>
    %73 = vector.broadcast %72 : vector<1x8xf32> to vector<4x8xf32>
    %74 = arith.subf %70, %73 : vector<4x8xf32>
    %75 = math.exp %74 : vector<4x8xf32>
    %cst_32 = arith.constant dense<0.000000e+00> : vector<8xf32>
    %76 = vector.multi_reduction <add>, %75, %cst_32 [0] : vector<4x8xf32> to vector<8xf32>
    %77 = vector.shape_cast %76 : vector<8xf32> to vector<1x8xf32>
    %78 = tpu.reciprocal %77 {approx = true} : vector<1x8xf32> -> vector<1x8xf32>
    %79 = vector.broadcast %78 : vector<1x8xf32> to vector<4x8xf32>
    %80 = arith.mulf %75, %79 : vector<4x8xf32>
    %c0_33 = arith.constant 0 : index
    %c0_34 = arith.constant 0 : index
    %c0_35 = arith.constant 0 : index
    %81 = vector.load %arg8[%c0_33, %c0_34, %c0_35] : memref<1x4x8xf32, #tpu.memory_space<vmem>>, vector<1x4x8xf32>
    %82 = vector.shape_cast %81 : vector<1x4x8xf32> to vector<4x8xf32>
    %83 = vector.shape_cast %80 : vector<4x8xf32> to vector<1x4x8xf32>
    tpu.vector_store %arg8[%c0_33, %c0_34, %c0_35], %83 {strides = array<i32>} : memref<1x4x8xf32, #tpu.memory_space<vmem>>, vector<1x4x8xf32>,
    return
  }
  func.func @transform_0(%arg0: i32) -> (i32, i32, i32) {
    %c0_i32 = arith.constant 0 : i32
    %c0_i32_0 = arith.constant 0 : i32
    %c0_i32_1 = arith.constant 0 : i32
    return %arg0, %c0_i32, %c0_i32_0 : i32, i32, i32
  }
  func.func @transform_1(%arg0: i32) -> (i32, i32, i32) {
    %c0_i32 = arith.constant 0 : i32
    %c0_i32_0 = arith.constant 0 : i32
    %c0_i32_1 = arith.constant 0 : i32
    return %arg0, %c0_i32, %c0_i32_0 : i32, i32, i32
  }
  func.func @transform_2(%arg0: i32) -> (i32, i32) {
    %c0_i32 = arith.constant 0 : i32
    %c0_i32_0 = arith.constant 0 : i32
    %c0_i32_1 = arith.constant 0 : i32
    return %c0_i32, %c0_i32_0 : i32, i32
  }
  func.func @transform_3(%arg0: i32) -> (i32, i32) {
    %c0_i32 = arith.constant 0 : i32
    %c0_i32_0 = arith.constant 0 : i32
    %c0_i32_1 = arith.constant 0 : i32
    return %c0_i32, %c0_i32_0 : i32, i32
  }
  func.func @transform_4(%arg0: i32) -> (i32, i32) {
    %c0_i32 = arith.constant 0 : i32
    %c0_i32_0 = arith.constant 0 : i32
    %c0_i32_1 = arith.constant 0 : i32
    return %c0_i32, %c0_i32_0 : i32, i32
  }
  func.func @transform_5(%arg0: i32) -> (i32, i32, i32) {
    %c0_i32 = arith.constant 0 : i32
    %c0_i32_0 = arith.constant 0 : i32
    %c0_i32_1 = arith.constant 0 : i32
    return %arg0, %c0_i32, %c0_i32_0 : i32, i32, i32
  }
  func.func @transform_6(%arg0: i32) -> (i32, i32, i32) {
    %c0_i32 = arith.constant 0 : i32
    %c0_i32_0 = arith.constant 0 : i32
    %c0_i32_1 = arith.constant 0 : i32
    return %arg0, %c0_i32, %c0_i32_0 : i32, i32, i32
  }
  func.func @transform_7(%arg0: i32) -> (i32, i32, i32) {
    %c0_i32 = arith.constant 0 : i32
    %c0_i32_0 = arith.constant 0 : i32
    %c0_i32_1 = arith.constant 0 : i32
    return %arg0, %c0_i32, %c0_i32_0 : i32, i32, i32
  }
}

</mosaic_0001>

<llo_original>
// kernel: tpu_custom_call.1
$region0: #{tpu_custom_call.1}
  #allocation0 [shape = 'u32[]', space=smem, size = 0x4, offset = 0x4, fixed_abs, tag = 'smem constant byte address 0x4 - core index']
  #allocation1 [shape = 'u32[144,128]{1,0:T(1,128)}', space=vmem, size = 0x12000, scoped, tag = 'internal scratch']
  %s0 = inlined_call_operand.vmem [shape: f32[2,4,32], index: 0, kind: input, shape index: {}]
  %s1 = inlined_call_operand.vmem [shape: f32[2,8,128], index: 1, kind: input, shape index: {}]
  %s2 = inlined_call_operand.vmem [shape: f32[128,32], index: 2, kind: input, shape index: {}]
  %s3 = inlined_call_operand.vmem [shape: f32[128,128], index: 3, kind: input, shape index: {}]
  %s4 = inlined_call_operand.vmem [shape: f32[4,128], index: 4, kind: input, shape index: {}]
  %s5 = inlined_call_operand.hbm [shape: f32[2,4,128], index: 5, kind: output, shape index: {0}]
  %s6 = inlined_call_operand.hbm [shape: f32[2,8,128], index: 6, kind: output, shape index: {1}]
  %s7 = inlined_call_operand.hbm [shape: f32[2,4,8], index: 7, kind: output, shape index: {2}]
  %8 = xla_tuple %s5, %s6, %s7
  %s9 = sld [smem:[#allocation0]]
  $region69: #{tpu_custom_call.1} parent=0
    _
  %s11 = ssub.s32 1, %s9
  %s12 = scalar_select 0, %s11, %s9
  $region1: #{tpu_custom_call.1} parent=0
    #allocation2 [shape = 'u8[4096]{0}', space=vmem, size = 0x1000, scoped, tag = 'output window, operand 0']
    #allocation3 [shape = 's32[2]{0}', space=sflag, size = 0x8, scoped, tag = 'scoped memory for tpu_custom_call.1']
    #allocation4 [shape = 'u8[8192]{0}', space=vmem, size = 0x2000, scoped, tag = 'output window, operand 1']
    #allocation5 [shape = 's32[2]{0}', space=sflag, size = 0x8, scoped, tag = 'scoped memory for tpu_custom_call.1']
    #allocation6 [shape = 'u8[4096]{0}', space=vmem, size = 0x1000, scoped, tag = 'output window, operand 2']
    %13 = vsyncpa [#allocation3], 0
    %s14 = scalar_lea.sflag [#allocation3], 1
    %15 = vsyncpa %s14, 0
    %16 = vsyncpa [#allocation5], 0
    %s17 = scalar_lea.sflag [#allocation5], 1
    %18 = vsyncpa %s17, 0
    loop: start=0, step=1, limit=4
    $region2: #{tpu_custom_call.1} parent=1 // loop_pre_header
      _
    $region3: #{tpu_custom_call.1} parent=1 // loop_header
      %s20 = sphi 0, %s24
      %p21 = scmp.ge.s32.totalorder %s20, 4
      %s30 = sphi 0, %s32
      %s33 = sphi 0, %s30
      %s34 = sphi 0, %s33
      %s50 = sphi 0, %s34
      %s56 = sphi 0, %s58
      %s59 = sphi 0, %s56
      %s60 = sphi 0, %s59
      %s76 = sphi 0, %s60
      %s80 = sphi 0, %s80
      %s82 = sphi 0, %s80
      %s83 = sphi 0, %s82
      %s97 = sphi 0, %s83
      %s101 = sphi 0, %s101
      %s103 = sphi 0, %s101
      %s104 = sphi 0, %s103
      %s118 = sphi 0, %s104
      %s122 = sphi 0, %s122
      %s124 = sphi 0, %s122
      %s125 = sphi 0, %s124
      %s139 = sphi 0, %s125
      %s145 = sphi 0, %s147
      %s148 = sphi 0, %s145
      %s149 = sphi 0, %s148
      %s165 = sphi 0, %s149
      %s171 = sphi 0, %s173
      %s174 = sphi 0, %s171
      %s175 = sphi 0, %s174
      %s191 = sphi 0, %s175
      %s197 = sphi 0, %s199
      %s200 = sphi 0, %s197
      %s201 = sphi 0, %s200
      %s217 = sphi 0, %s201
    $region4: #{tpu_custom_call.1} parent=1 // loop_header_branch
      %23 = sbr.rel (%p21) target = $region8
    $region5: #{tpu_custom_call.1} parent=1 // loop_body
      %s25 = ssub.s32 %s20, 1
      %s26 = ssub.s32 %s20, 2
      %s27 = sadd.s32 %s20, 1
      %s28 = ssub.s32 %s20, %s27
      %p29 = scmp.eq.s32.totalorder %s28, 0
      %s31 = sadd.s32 %s30, 1
      %s32 = scalar_select %p29, %s30, %s31
      %p35 = pneg %p29
      %p36 = scmp.eq.s32.totalorder %s20, 1
      %p37 = por %p35, %p36
      %p38 = scmp.ne.s32.totalorder %s30, %s33
      %p39 = scmp.eq.s32.totalorder %s20, 0
      %p40 = por %p38, %p39
      %p41 = scmp.ne.s32.totalorder %s30, %s33
      %p42 = scmp.eq.s32.totalorder %s25, 1
      %p43 = por %p41, %p42
      %p44 = scmp.ne.s32.totalorder %s33, %s34
      %p45 = scmp.eq.s32.totalorder %s25, 0
      %p46 = por %p44, %p45
      %p47 = scmp.ne.s32.totalorder %s33, %s34
      %p48 = scmp.eq.s32.totalorder %s26, 1
      %p49 = por %p47, %p48
      %p51 = scmp.ne.s32.totalorder %s34, %s50
      %p52 = scmp.eq.s32.totalorder %s26, 0
      %p53 = por %p51, %p52
      %s54 = ssub.s32 %s20, %s27
      %p55 = scmp.eq.s32.totalorder %s54, 0
      %s57 = sadd.s32 %s56, 1
      %s58 = scalar_select %p55, %s56, %s57
      %p61 = pneg %p55
      %p62 = scmp.eq.s32.totalorder %s20, 1
      %p63 = por %p61, %p62
      %p64 = scmp.ne.s32.totalorder %s56, %s59
      %p65 = scmp.eq.s32.totalorder %s20, 0
      %p66 = por %p64, %p65
      %p67 = scmp.ne.s32.totalorder %s56, %s59
      %p68 = scmp.eq.s32.totalorder %s25, 1
      %p69 = por %p67, %p68
      %p70 = scmp.ne.s32.totalorder %s59, %s60
      %p71 = scmp.eq.s32.totalorder %s25, 0
      %p72 = por %p70, %p71
      %p73 = scmp.ne.s32.totalorder %s59, %s60
      %p74 = scmp.eq.s32.totalorder %s26, 1
      %p75 = por %p73, %p74
      %p77 = scmp.ne.s32.totalorder %s60, %s76
      %p78 = scmp.eq.s32.totalorder %s26, 0
      %p79 = por %p77, %p78
      %s81 = sadd.s32 %s80, 1
      %p84 = scmp.eq.s32.totalorder %s20, 1
      %p85 = scmp.ne.s32.totalorder %s80, %s82
      %p86 = scmp.eq.s32.totalorder %s20, 0
      %p87 = por %p85, %p86
      %p88 = scmp.ne.s32.totalorder %s80, %s82
      %p89 = scmp.eq.s32.totalorder %s25, 1
      %p90 = por %p88, %p89
      %p91 = scmp.ne.s32.totalorder %s82, %s83
      %p92 = scmp.eq.s32.totalorder %s25, 0
      %p93 = por %p91, %p92
      %p94 = scmp.ne.s32.totalorder %s82, %s83
      %p95 = scmp.eq.s32.totalorder %s26, 1
      %p96 = por %p94, %p95
      %p98 = scmp.ne.s32.totalorder %s83, %s97
      %p99 = scmp.eq.s32.totalorder %s26, 0
      %p100 = por %p98, %p99
      %s102 = sadd.s32 %s101, 1
      %p105 = scmp.eq.s32.totalorder %s20, 1
      %p106 = scmp.ne.s32.totalorder %s101, %s103
      %p107 = scmp.eq.s32.totalorder %s20, 0
      %p108 = por %p106, %p107
      %p109 = scmp.ne.s32.totalorder %s101, %s103
      %p110 = scmp.eq.s32.totalorder %s25, 1
      %p111 = por %p109, %p110
      %p112 = scmp.ne.s32.totalorder %s103, %s104
      %p113 = scmp.eq.s32.totalorder %s25, 0
      %p114 = por %p112, %p113
      %p115 = scmp.ne.s32.totalorder %s103, %s104
      %p116 = scmp.eq.s32.totalorder %s26, 1
      %p117 = por %p115, %p116
      %p119 = scmp.ne.s32.totalorder %s104, %s118
      %p120 = scmp.eq.s32.totalorder %s26, 0
      %p121 = por %p119, %p120
      %s123 = sadd.s32 %s122, 1
      %p126 = scmp.eq.s32.totalorder %s20, 1
      %p127 = scmp.ne.s32.totalorder %s122, %s124
      %p128 = scmp.eq.s32.totalorder %s20, 0
      %p129 = por %p127, %p128
      %p130 = scmp.ne.s32.totalorder %s122, %s124
      %p131 = scmp.eq.s32.totalorder %s25, 1
      %p132 = por %p130, %p131
      %p133 = scmp.ne.s32.totalorder %s124, %s125
      %p134 = scmp.eq.s32.totalorder %s25, 0
      %p135 = por %p133, %p134
      %p136 = scmp.ne.s32.totalorder %s124, %s125
      %p137 = scmp.eq.s32.totalorder %s26, 1
      %p138 = por %p136, %p137
      %p140 = scmp.ne.s32.totalorder %s125, %s139
      %p141 = scmp.eq.s32.totalorder %s26, 0
      %p142 = por %p140, %p141
      %s143 = ssub.s32 %s20, %s27
      %p144 = scmp.eq.s32.totalorder %s143, 0
      %s146 = sadd.s32 %s145, 1
      %s147 = scalar_select %p144, %s145, %s146
      %p150 = pneg %p144
      %p151 = scmp.eq.s32.totalorder %s20, 1
      %p152 = por %p150, %p151
      %p153 = scmp.ne.s32.totalorder %s145, %s148
      %p154 = scmp.eq.s32.totalorder %s20, 0
      %p155 = por %p153, %p154
      %p156 = scmp.ne.s32.totalorder %s145, %s148
      %p157 = scmp.eq.s32.totalorder %s25, 1
      %p158 = por %p156, %p157
      %p159 = scmp.ne.s32.totalorder %s148, %s149
      %p160 = scmp.eq.s32.totalorder %s25, 0
      %p161 = por %p159, %p160
      %p162 = scmp.ne.s32.totalorder %s148, %s149
      %p163 = scmp.eq.s32.totalorder %s26, 1
      %p164 = por %p162, %p163
      %p166 = scmp.ne.s32.totalorder %s149, %s165
      %p167 = scmp.eq.s32.totalorder %s26, 0
      %p168 = por %p166, %p167
      %s169 = ssub.s32 %s20, %s27
      %p170 = scmp.eq.s32.totalorder %s169, 0
      %s172 = sadd.s32 %s171, 1
      %s173 = scalar_select %p170, %s171, %s172
      %p176 = pneg %p170
      %p177 = scmp.eq.s32.totalorder %s20, 1
      %p178 = por %p176, %p177
      %p179 = scmp.ne.s32.totalorder %s171, %s174
      %p180 = scmp.eq.s32.totalorder %s20, 0
      %p181 = por %p179, %p180
      %p182 = scmp.ne.s32.totalorder %s171, %s174
      %p183 = scmp.eq.s32.totalorder %s25, 1
      %p184 = por %p182, %p183
      %p185 = scmp.ne.s32.totalorder %s174, %s175
      %p186 = scmp.eq.s32.totalorder %s25, 0
      %p187 = por %p185, %p186
      %p188 = scmp.ne.s32.totalorder %s174, %s175
      %p189 = scmp.eq.s32.totalorder %s26, 1
      %p190 = por %p188, %p189
      %p192 = scmp.ne.s32.totalorder %s175, %s191
      %p193 = scmp.eq.s32.totalorder %s26, 0
      %p194 = por %p192, %p193
      %s195 = ssub.s32 %s20, %s27
      %p196 = scmp.eq.s32.totalorder %s195, 0
      %s198 = sadd.s32 %s197, 1
      %s199 = scalar_select %p196, %s197, %s198
      %p202 = pneg %p196
      %p203 = scmp.eq.s32.totalorder %s20, 1
      %p204 = por %p202, %p203
      %p205 = scmp.ne.s32.totalorder %s197, %s200
      %p206 = scmp.eq.s32.totalorder %s20, 0
      %p207 = por %p205, %p206
      %p208 = scmp.ne.s32.totalorder %s197, %s200
      %p209 = scmp.eq.s32.totalorder %s25, 1
      %p210 = por %p208, %p209
      %p211 = scmp.ne.s32.totalorder %s200, %s201
      %p212 = scmp.eq.s32.totalorder %s25, 0
      %p213 = por %p211, %p212
      %p214 = scmp.ne.s32.totalorder %s200, %s201
      %p215 = scmp.eq.s32.totalorder %s26, 1
      %p216 = por %p214, %p215
      %p218 = scmp.ne.s32.totalorder %s201, %s217
      %p219 = scmp.eq.s32.totalorder %s26, 0
      %p220 = por %p218, %p219
      %p221 = scmp.le.s32.totalorder 1, %s20
      %p222 = scmp.lt.s32.totalorder %s20, 3
      %p223 = pnand %p221, %p222
      %p224 = pneg %p223
      // Predicated region
      $region9: #{tpu_custom_call.1} parent=5 // pred_check
        _
      $region10: #{tpu_custom_call.1} parent=5 // pred_check_branch
        %226 = sbr.rel (%p223) target = $region12
      $region11: #{tpu_custom_call.1} parent=5 // pred_region
        %s227 = ssub.s32 %s20, 1
        // Predicated region
        $region13: #{tpu_custom_call.1} parent=11 // pred_check
          %p228 = pneg %p93
        $region14: #{tpu_custom_call.1} parent=11 // pred_check_branch
          %230 = sbr.rel (%p228) target = $region16
        $region15: #{tpu_custom_call.1} parent=11 // pred_region
          _
        $region16: #{tpu_custom_call.1} parent=11 // pred_fallthru
          _
        // Predicated region
        $region17: #{tpu_custom_call.1} parent=11 // pred_check
          %p231 = pneg %p114
        $region18: #{tpu_custom_call.1} parent=11 // pred_check_branch
          %233 = sbr.rel (%p231) target = $region20
        $region19: #{tpu_custom_call.1} parent=11 // pred_region
          _
        $region20: #{tpu_custom_call.1} parent=11 // pred_fallthru
          _
        // Predicated region
        $region21: #{tpu_custom_call.1} parent=11 // pred_check
          %p234 = pneg %p135
        $region22: #{tpu_custom_call.1} parent=11 // pred_check_branch
          %236 = sbr.rel (%p234) target = $region24
        $region23: #{tpu_custom_call.1} parent=11 // pred_region
          _
        $region24: #{tpu_custom_call.1} parent=11 // pred_fallthru
          _
      $region12: #{tpu_custom_call.1} parent=5 // pred_fallthru
        _
      %p237 = scmp.lt.s32.totalorder %s20, 2
      // Predicated region
      $region25: #{tpu_custom_call.1} parent=5 // pred_check
        %p238 = pneg %p237
      $region26: #{tpu_custom_call.1} parent=5 // pred_check_branch
        %240 = sbr.rel (%p238) target = $region28
      $region27: #{tpu_custom_call.1} parent=5 // pred_region
        // Predicated region
        $region29: #{tpu_custom_call.1} parent=27 // pred_check
          %p241 = pneg %p40
        $region30: #{tpu_custom_call.1} parent=27 // pred_check_branch
          %243 = sbr.rel (%p241) target = $region32
        $region31: #{tpu_custom_call.1} parent=27 // pred_region
          %p244 = scmp.lt.s32.totalorder %s20, 1
          %s245 = scalar_select %p244, %s20, 1
          %s246 = smul.addr %s245, 4
          %s247 = scalar_lea.vmem %s0, %s246
        $region32: #{tpu_custom_call.1} parent=27 // pred_fallthru
          _
        // Predicated region
        $region33: #{tpu_custom_call.1} parent=27 // pred_check
          %p248 = pneg %p66
        $region34: #{tpu_custom_call.1} parent=27 // pred_check_branch
          %250 = sbr.rel (%p248) target = $region36
        $region35: #{tpu_custom_call.1} parent=27 // pred_region
          %p251 = scmp.lt.s32.totalorder %s20, 1
          %s252 = scalar_select %p251, %s20, 1
          %s253 = smul.addr %s252, 8
          %s254 = scalar_lea.vmem %s1, %s253
        $region36: #{tpu_custom_call.1} parent=27 // pred_fallthru
          _
      $region28: #{tpu_custom_call.1} parent=5 // pred_fallthru
        _
      %p255 = scmp.le.s32.totalorder 1, %s20
      %p256 = scmp.lt.s32.totalorder %s20, 3
      %p257 = pnand %p255, %p256
      %p258 = pneg %p257
      // Predicated region
      $region37: #{tpu_custom_call.1} parent=5 // pred_check
        _
      $region38: #{tpu_custom_call.1} parent=5 // pred_check_branch
        %260 = sbr.rel (%p257) target = $region40
      $region39: #{tpu_custom_call.1} parent=5 // pred_region
        %s261 = ssub.s32 %s20, 1
        %p262 = scmp.lt.s32.totalorder %s25, 1
        %s263 = scalar_select %p262, %s25, 1
        %s264 = smul.addr %s263, 4
        %s265 = scalar_lea.vmem %s0, %s264
        %p266 = pneg %p46
        %p267 = pneg %p43
        %p268 = scmp.lt.s32.totalorder %s25, 1
        %s269 = scalar_select %p268, %s25, 1
        %s270 = smul.addr %s269, 8
        %s271 = scalar_lea.vmem %s1, %s270
        %p272 = pneg %p72
        %p273 = pneg %p69
        %p274 = pneg %p93
        %p275 = pneg %p90
        %p276 = pneg %p114
        %p277 = pneg %p111
        %p278 = pneg %p135
        %p279 = pneg %p132
        %p280 = pneg %p161
        %p281 = pneg %p158
        %s282 = sand.u32 %s148, 1
        %s283 = scalar_lea.sflag [#allocation3], %s282
        %s284 = sand.u32 %s148, 1
        %s285 = smul.addr %s284, 4
        %s286 = scalar_lea.vmem [#allocation2], %s285
        %p287 = pneg %p187
        %p288 = pneg %p184
        %s289 = sand.u32 %s25, 1
        %s290 = scalar_lea.sflag [#allocation5], %s289
        %s291 = sand.u32 %s174, 1
        %s292 = smul.addr %s291, 8
        %s293 = scalar_lea.vmem [#allocation4], %s292
        %p294 = pneg %p213
        %p295 = pneg %p210
        %s296 = sand.u32 %s25, 1
        %s297 = scalar_lea.sflag [#allocation5], %s296
        %s298 = sand.u32 %s200, 1
        %s299 = smul.addr %s298, 4
        %s300 = scalar_lea.vmem [#allocation6], %s299
        %p301 = scmp.lt.s32.totalorder %s25, 1
        %s302 = scalar_select %p301, %s25, 1
        %s303 = smul.addr %s302, 4
        %s304 = scalar_lea.vmem %s0, %s303
        %p305 = scmp.lt.s32.totalorder %s25, 1
        %s306 = scalar_select %p305, %s25, 1
        %s307 = smul.addr %s306, 8
        %s308 = scalar_lea.vmem %s1, %s307
        %v309 = vld [vmem:[%s4] sm:$0xf]
        %v310 = vld [vmem:[%s304] sm:$0xf]
        %v311 = vld [vmem:[%s2] sm:$0xff]
        %v312 = vld [vmem:[%s2 + $0x8] sm:$0xff]
        %v313 = vld [vmem:[%s2 + $0x10] sm:$0xff]
        %v314 = vld [vmem:[%s2 + $0x18] sm:$0xff]
        %v315 = vld [vmem:[%s2 + $0x20] sm:$0xff]
        %v316 = vld [vmem:[%s2 + $0x28] sm:$0xff]
        %v317 = vld [vmem:[%s2 + $0x30] sm:$0xff]
        %v318 = vld [vmem:[%s2 + $0x38] sm:$0xff]
        %v319 = vld [vmem:[%s2 + $0x40] sm:$0xff]
        %v320 = vld [vmem:[%s2 + $0x48] sm:$0xff]
        %v321 = vld [vmem:[%s2 + $0x50] sm:$0xff]
        %v322 = vld [vmem:[%s2 + $0x58] sm:$0xff]
        %v323 = vld [vmem:[%s2 + $0x60] sm:$0xff]
        %v324 = vld [vmem:[%s2 + $0x68] sm:$0xff]
        %v325 = vld [vmem:[%s2 + $0x70] sm:$0xff]
        %v326 = vld [vmem:[%s2 + $0x78] sm:$0xff]
        %v327 = vlaneseq
        %v328 = vshrl.u32 %v327, 7
        %v329 = vsub.s32 0, %v328
        %v330 = vrot.slane %v309, %v329
        %vm331 = vcmask 261120
        %v333 = vsel %vm331, %v310, 0
        %v336 = vsel %vm331, %v311, 0
        %v339 = vsel %vm331, %v312, 0
        %v342 = vsel %vm331, %v313, 0
        %v345 = vsel %vm331, %v314, 0
        %v348 = vsel %vm331, %v315, 0
        %v351 = vsel %vm331, %v316, 0
        %v354 = vsel %vm331, %v317, 0
        %v357 = vsel %vm331, %v318, 0
        %v360 = vsel %vm331, %v319, 0
        %v363 = vsel %vm331, %v320, 0
        %v366 = vsel %vm331, %v321, 0
        %v369 = vsel %vm331, %v322, 0
        %v372 = vsel %vm331, %v323, 0
        %v375 = vsel %vm331, %v324, 0
        %v378 = vsel %vm331, %v325, 0
        %v381 = vsel %vm331, %v326, 0
        %383 = vmatprep.subr.mxu0 0.0
        %384 = vmatpush1.xpose.msra.mxu0 %v336
        %385 = vmatprep.subr.mxu0 0.0
        %386 = vmatpush1.xpose.msra.mxu0 %v339
        %387 = vmatprep.subr.mxu0 0.0
        %388 = vmatpush1.xpose.msra.mxu0 %v342
        %389 = vmatprep.subr.mxu0 0.0
        %390 = vmatpush1.xpose.msra.mxu0 %v345
        %391 = vmatprep.subr.mxu0 0.0
        %392 = vmatpush1.xpose.msra.mxu0 %v348
        %393 = vmatprep.subr.mxu0 0.0
        %394 = vmatpush1.xpose.msra.mxu0 %v351
        %395 = vmatprep.subr.mxu0 0.0
        %396 = vmatpush1.xpose.msra.mxu0 %v354
        %397 = vmatprep.subr.mxu0 0.0
        %398 = vmatpush1.xpose.msra.mxu0 %v357
        %399 = vmatprep.subr.mxu0 0.0
        %400 = vmatpush1.xpose.msra.mxu0 %v360
        %401 = vmatprep.subr.mxu0 0.0
        %402 = vmatpush1.xpose.msra.mxu0 %v363
        %403 = vmatprep.subr.mxu0 0.0
        %404 = vmatpush1.xpose.msra.mxu0 %v366
        %405 = vmatprep.subr.mxu0 0.0
        %406 = vmatpush1.xpose.msra.mxu0 %v369
        %407 = vmatprep.subr.mxu0 0.0
        %408 = vmatpush1.xpose.msra.mxu0 %v372
        %409 = vmatprep.subr.mxu0 0.0
        %410 = vmatpush1.xpose.msra.mxu0 %v375
        %411 = vmatprep.subr.mxu0 0.0
        %412 = vmatpush1.xpose.msra.mxu0 %v378
        %413 = vmatprep.subr.mxu0 0.0
        %414 = vmatpush1.xpose.msra.mxu0 %v381
        %415 = vmatprep.subr.mxu0 0.0
        %416 = vmatpush1.xpose.msra.mxu0 0.0
        %417 = vmatprep.subr.mxu0 0.0
        %418 = vmatpush1.xpose.msra.mxu0 0.0
        %419 = vmatprep.subr.mxu0 0.0
        %420 = vmatpush1.xpose.msra.mxu0 0.0
        %421 = vmatprep.subr.mxu0 0.0
        %422 = vmatpush1.xpose.msra.mxu0 0.0
        %423 = vmatprep.subr.mxu0 0.0
        %424 = vmatpush1.xpose.msra.mxu0 0.0
        %425 = vmatprep.subr.mxu0 0.0
        %426 = vmatpush1.xpose.msra.mxu0 0.0
        %427 = vmatprep.subr.mxu0 0.0
        %428 = vmatpush1.xpose.msra.mxu0 0.0
        %429 = vmatprep.subr.mxu0 0.0
        %430 = vmatpush1.xpose.msra.mxu0 0.0
        %431 = vmatprep.subr.mxu0 0.0
        %432 = vmatpush1.xpose.msra.mxu0 0.0
        %433 = vmatprep.subr.mxu0 0.0
        %434 = vmatpush1.xpose.msra.mxu0 0.0
        %435 = vmatprep.subr.mxu0 0.0
        %436 = vmatpush1.xpose.msra.mxu0 0.0
        %437 = vmatprep.subr.mxu0 0.0
        %438 = vmatpush1.xpose.msra.mxu0 0.0
        %439 = vmatprep.subr.mxu0 0.0
        %440 = vmatpush1.xpose.msra.mxu0 0.0
        %441 = vmatprep.subr.mxu0 0.0
        %442 = vmatpush1.xpose.msra.mxu0 0.0
        %443 = vmatprep.subr.mxu0 0.0
        %444 = vmatpush1.xpose.msra.mxu0 0.0
        %445 = vmatprep.subr.mxu0 0.0
        %446 = vmatpush1.xpose.msra.mxu0 0.0
        %447 = vmatprep.mubr.f32.mxu0 0.0
        %448 = vmatmul.mubr.f32.gmra.mrb[0].mxu0 %v333
        %v449 = vpop.f32.mrb[0].mxu0
        %v450 = vadd.f32 %v330, %v449
        %v451 = vpop.f32.mrb[0].mxu0
        %452 = vdwg.mxu0
        %vm453 = vcmask 1043456
        %v454 = vsel %vm453, %v450, 0.0
        %455 = vadd.xlane.f32.xlu0 %v454
        %v456 = vpop.xlane.xlu0 %455
        %v457 = vrcp.pop 128.0
        %v458 = vmul.f32 %v456, %v457
        %v459 = vsub.f32 %v450, %v458
        %v460 = vmul.f32 %v459, %v459
        %v461 = vsel %vm453, %v460, 0.0
        %462 = vadd.xlane.f32.xlu0 %v461
        %v463 = vpop.xlane.xlu0 %462
        %v464 = vmul.f32 %v463, %v457
        %v465 = vadd.f32 %v464, 1e-05
        %v466 = vrsqrt.pop %v465
        %v467 = vmul.f32 %v459, %v466
        %v468 = vlaneseq
        %v469 = vshrl.u32 %v468, 7
        %v470 = vsub.s32 2, %v469
        %v471 = vrot.slane %v309, %v470
        %v472 = vmul.f32 %v467, %v471
        %v473 = vlaneseq
        %v474 = vshrl.u32 %v473, 7
        %v475 = vsub.s32 3, %v474
        %v476 = vrot.slane %v309, %v475
        %v477 = vadd.f32 %v472, %v476
        %478 = vst [vmem:[%s286] sm:$0xf] %v477
        %v479 = vld [vmem:[%s308] sm:$0xff]
        %v480 = vld [vmem:[%s3] sm:$0xff]
        %v481 = vld [vmem:[%s3 + $0x8] sm:$0xff]
        %v482 = vld [vmem:[%s3 + $0x10] sm:$0xff]
        %v483 = vld [vmem:[%s3 + $0x18] sm:$0xff]
        %v484 = vld [vmem:[%s3 + $0x20] sm:$0xff]
        %v485 = vld [vmem:[%s3 + $0x28] sm:$0xff]
        %v486 = vld [vmem:[%s3 + $0x30] sm:$0xff]
        %v487 = vld [vmem:[%s3 + $0x38] sm:$0xff]
        %v488 = vld [vmem:[%s3 + $0x40] sm:$0xff]
        %v489 = vld [vmem:[%s3 + $0x48] sm:$0xff]
        %v490 = vld [vmem:[%s3 + $0x50] sm:$0xff]
        %v491 = vld [vmem:[%s3 + $0x58] sm:$0xff]
        %v492 = vld [vmem:[%s3 + $0x60] sm:$0xff]
        %v493 = vld [vmem:[%s3 + $0x68] sm:$0xff]
        %v494 = vld [vmem:[%s3 + $0x70] sm:$0xff]
        %v495 = vld [vmem:[%s3 + $0x78] sm:$0xff]
        %v496 = vlaneseq
        %v497 = vshrl.u32 %v496, 7
        %v498 = vsub.s32 1, %v497
        %v499 = vrot.slane %v309, %v498
        %500 = vmatprep.subr.mxu0 0.0
        %501 = vmatpush1.xpose.msra.mxu0 %v480
        %502 = vmatprep.subr.mxu0 0.0
        %503 = vmatpush1.xpose.msra.mxu0 %v481
        %504 = vmatprep.subr.mxu0 0.0
        %505 = vmatpush1.xpose.msra.mxu0 %v482
        %506 = vmatprep.subr.mxu0 0.0
        %507 = vmatpush1.xpose.msra.mxu0 %v483
        %508 = vmatprep.subr.mxu0 0.0
        %509 = vmatpush1.xpose.msra.mxu0 %v484
        %510 = vmatprep.subr.mxu0 0.0
        %511 = vmatpush1.xpose.msra.mxu0 %v485
        %512 = vmatprep.subr.mxu0 0.0
        %513 = vmatpush1.xpose.msra.mxu0 %v486
        %514 = vmatprep.subr.mxu0 0.0
        %515 = vmatpush1.xpose.msra.mxu0 %v487
        %516 = vmatprep.subr.mxu0 0.0
        %517 = vmatpush1.xpose.msra.mxu0 %v488
        %518 = vmatprep.subr.mxu0 0.0
        %519 = vmatpush1.xpose.msra.mxu0 %v489
        %520 = vmatprep.subr.mxu0 0.0
        %521 = vmatpush1.xpose.msra.mxu0 %v490
        %522 = vmatprep.subr.mxu0 0.0
        %523 = vmatpush1.xpose.msra.mxu0 %v491
        %524 = vmatprep.subr.mxu0 0.0
        %525 = vmatpush1.xpose.msra.mxu0 %v492
        %526 = vmatprep.subr.mxu0 0.0
        %527 = vmatpush1.xpose.msra.mxu0 %v493
        %528 = vmatprep.subr.mxu0 0.0
        %529 = vmatpush1.xpose.msra.mxu0 %v494
        %530 = vmatprep.subr.mxu0 0.0
        %531 = vmatpush1.xpose.msra.mxu0 %v495
        %532 = vmatprep.subr.mxu0 0.0
        %533 = vmatpush1.xpose.msra.mxu0 0.0
        %534 = vmatprep.subr.mxu0 0.0
        %535 = vmatpush1.xpose.msra.mxu0 0.0
        %536 = vmatprep.subr.mxu0 0.0
        %537 = vmatpush1.xpose.msra.mxu0 0.0
        %538 = vmatprep.subr.mxu0 0.0
        %539 = vmatpush1.xpose.msra.mxu0 0.0
        %540 = vmatprep.subr.mxu0 0.0
        %541 = vmatpush1.xpose.msra.mxu0 0.0
        %542 = vmatprep.subr.mxu0 0.0
        %543 = vmatpush1.xpose.msra.mxu0 0.0
        %544 = vmatprep.subr.mxu0 0.0
        %545 = vmatpush1.xpose.msra.mxu0 0.0
        %546 = vmatprep.subr.mxu0 0.0
        %547 = vmatpush1.xpose.msra.mxu0 0.0
        %548 = vmatprep.subr.mxu0 0.0
        %549 = vmatpush1.xpose.msra.mxu0 0.0
        %550 = vmatprep.subr.mxu0 0.0
        %551 = vmatpush1.xpose.msra.mxu0 0.0
        %552 = vmatprep.subr.mxu0 0.0
        %553 = vmatpush1.xpose.msra.mxu0 0.0
        %554 = vmatprep.subr.mxu0 0.0
        %555 = vmatpush1.xpose.msra.mxu0 0.0
        %556 = vmatprep.subr.mxu0 0.0
        %557 = vmatpush1.xpose.msra.mxu0 0.0
        %558 = vmatprep.subr.mxu0 0.0
        %559 = vmatpush1.xpose.msra.mxu0 0.0
        %560 = vmatprep.subr.mxu0 0.0
        %561 = vmatpush1.xpose.msra.mxu0 0.0
        %562 = vmatprep.subr.mxu0 0.0
        %563 = vmatpush1.xpose.msra.mxu0 0.0
        %564 = vmatprep.mubr.f32.mxu0 0.0
        %565 = vmatmul.mubr.f32.gmra.mrb[0].mxu0 %v479
        %v566 = vpop.f32.mrb[0].mxu0
        %v567 = vadd.f32 %v499, %v566
        %v568 = vpop.f32.mrb[0].mxu0
        %569 = vdwg.mxu0
        %570 = vadd.xlane.f32.xlu0 %v567
        %v571 = vpop.xlane.xlu0 %570
        %v572 = vmul.f32 %v571, %v457
        %v573 = vsub.f32 %v567, %v572
        %v574 = vmul.f32 %v573, %v573
        %575 = vadd.xlane.f32.xlu0 %v574
        %v576 = vpop.xlane.xlu0 %575
        %v577 = vmul.f32 %v576, %v457
        %v578 = vadd.f32 %v577, 1e-05
        %v579 = vrsqrt.pop %v578
        %v580 = vmul.f32 %v573, %v579
        %v581 = vmul.f32 %v580, %v471
        %v582 = vadd.f32 %v581, %v476
        %583 = vst [vmem:[%s293] sm:$0xff] %v582
        %584 = vmatprep.subr.mxu0 0.0
        %585 = vmatpush1.xpose.msra.mxu0 %v582
        %586 = vmatprep.subr.mxu0 0.0
        %587 = vmatpush1.xpose.msra.mxu0 0.0
        %588 = vmatprep.subr.mxu0 0.0
        %589 = vmatpush1.xpose.msra.mxu0 0.0
        %590 = vmatprep.subr.mxu0 0.0
        %591 = vmatpush1.xpose.msra.mxu0 0.0
        %592 = vmatprep.subr.mxu0 0.0
        %593 = vmatpush1.xpose.msra.mxu0 0.0
        %594 = vmatprep.subr.mxu0 0.0
        %595 = vmatpush1.xpose.msra.mxu0 0.0
        %596 = vmatprep.subr.mxu0 0.0
        %597 = vmatpush1.xpose.msra.mxu0 0.0
        %598 = vmatprep.subr.mxu0 0.0
        %599 = vmatpush1.xpose.msra.mxu0 0.0
        %600 = vmatprep.subr.mxu0 0.0
        %601 = vmatpush1.xpose.msra.mxu0 0.0
        %602 = vmatprep.subr.mxu0 0.0
        %603 = vmatpush1.xpose.msra.mxu0 0.0
        %604 = vmatprep.subr.mxu0 0.0
        %605 = vmatpush1.xpose.msra.mxu0 0.0
        %606 = vmatprep.subr.mxu0 0.0
        %607 = vmatpush1.xpose.msra.mxu0 0.0
        %608 = vmatprep.subr.mxu0 0.0
        %609 = vmatpush1.xpose.msra.mxu0 0.0
        %610 = vmatprep.subr.mxu0 0.0
        %611 = vmatpush1.xpose.msra.mxu0 0.0
        %612 = vmatprep.subr.mxu0 0.0
        %613 = vmatpush1.xpose.msra.mxu0 0.0
        %614 = vmatprep.subr.mxu0 0.0
        %615 = vmatpush1.xpose.msra.mxu0 0.0
        %616 = vmatprep.subr.mxu0 0.0
        %617 = vmatpush1.xpose.msra.mxu0 0.0
        %618 = vmatprep.subr.mxu0 0.0
        %619 = vmatpush1.xpose.msra.mxu0 0.0
        %620 = vmatprep.subr.mxu0 0.0
        %621 = vmatpush1.xpose.msra.mxu0 0.0
        %622 = vmatprep.subr.mxu0 0.0
        %623 = vmatpush1.xpose.msra.mxu0 0.0
        %624 = vmatprep.subr.mxu0 0.0
        %625 = vmatpush1.xpose.msra.mxu0 0.0
        %626 = vmatprep.subr.mxu0 0.0
        %627 = vmatpush1.xpose.msra.mxu0 0.0
        %628 = vmatprep.subr.mxu0 0.0
        %629 = vmatpush1.xpose.msra.mxu0 0.0
        %630 = vmatprep.subr.mxu0 0.0
        %631 = vmatpush1.xpose.msra.mxu0 0.0
        %632 = vmatprep.subr.mxu0 0.0
        %633 = vmatpush1.xpose.msra.mxu0 0.0
        %634 = vmatprep.subr.mxu0 0.0
        %635 = vmatpush1.xpose.msra.mxu0 0.0
        %636 = vmatprep.subr.mxu0 0.0
        %637 = vmatpush1.xpose.msra.mxu0 0.0
        %638 = vmatprep.subr.mxu0 0.0
        %639 = vmatpush1.xpose.msra.mxu0 0.0
        %640 = vmatprep.subr.mxu0 0.0
        %641 = vmatpush1.xpose.msra.mxu0 0.0
        %642 = vmatprep.subr.mxu0 0.0
        %643 = vmatpush1.xpose.msra.mxu0 0.0
        %644 = vmatprep.subr.mxu0 0.0
        %645 = vmatpush1.xpose.msra.mxu0 0.0
        %646 = vmatprep.subr.mxu0 0.0
        %647 = vmatpush1.xpose.msra.mxu0 0.0
        %648 = vmatprep.mubr.f32.mxu0 0.0
        %649 = vmatmul.mubr.f32.gmra.mrb[0].mxu0 %v477
        %v650 = vpop.f32.mrb[0].mxu0
        %v651 = vadd.f32 0.0, %v650
        %v652 = vpop.f32.mrb[0].mxu0
        %653 = vdwg.mxu0
        %v654 = vmul.f32 %v477, %v477
        %v655 = vsel %vm453, %v654, 0.0
        %656 = vadd.xlane.f32.xlu0 %v655
        %v657 = vpop.xlane.xlu0 %656
        %v658 = vmul.f32 %v651, 2.0
        %v659 = vsub.f32 %v658, %v657
        %vm660 = vcmask 60416
        %v661 = vsel %vm660, %v659, -inf
        %v662 = vrot.slane %v661, 4
        %v663 = vmax.f32 %v661, %v662
        %v664 = vrot.slane %v663, 2
        %v665 = vmax.f32 %v663, %v664
        %v666 = vrot.slane %v665, 1
        %v667 = vmax.f32 %v665, %v666
        %v668 = vsub.f32 %v659, %v667
        %v669 = vmul.f32 %v668, 1.442695
        %v670 = vpow.pop %v669
        %v671 = vsel %vm660, %v670, 0.0
        %v672 = vrot.slane %v671, 4
        %v673 = vadd.f32 %v671, %v672
        %v674 = vrot.slane %v673, 2
        %v675 = vadd.f32 %v673, %v674
        %v676 = vrot.slane %v675, 1
        %v677 = vadd.f32 %v675, %v676
        %v678 = vrcp.pop %v677
        %v679 = vmul.f32 %v670, %v678
        %680 = vst.msk [vmem:[%s300] sm:$0xf] %vm660, %v679
        %s681 = sand.u32 %s148, 1
        %s682 = scalar_lea.sflag [#allocation3], %s681
        %s683 = sand.u32 %s148, 1
        %s684 = smul.addr %s683, 4
        %s685 = scalar_lea.vmem [#allocation2], %s684
        %s686 = sand.u32 %s25, 1
        %s687 = scalar_lea.sflag [#allocation5], %s686
        %s688 = sand.u32 %s174, 1
        %s689 = smul.addr %s688, 8
        %s690 = scalar_lea.vmem [#allocation4], %s689
        %s691 = sand.u32 %s25, 1
        %s692 = scalar_lea.sflag [#allocation5], %s691
        %s693 = sand.u32 %s200, 1
        %s694 = smul.addr %s693, 4
        %s695 = scalar_lea.vmem [#allocation6], %s694
        // Predicated region
        $region41: #{tpu_custom_call.1} parent=39 // pred_check
          %p696 = pneg %p158
        $region42: #{tpu_custom_call.1} parent=39 // pred_check_branch
          %698 = sbr.rel (%p696) target = $region44
        $region43: #{tpu_custom_call.1} parent=39 // pred_region
          %s700 = ssub.s32 64, 64
          %701 = vsyncadd %s682, %s700
          %s702 = smul.addr %s25, 64
          %s703 = scalar_lea.hbm %s5, %s702
          %s705 = sshll.u32 %s685, 4
          %s706 = int_to_ptr.vmem [resolvable:$true] %s705
          %708 = dma.vmem_to_hbm [thread:$0]  %s706, 64, %s703, %s682
        $region44: #{tpu_custom_call.1} parent=39 // pred_fallthru
          _
        // Predicated region
        $region45: #{tpu_custom_call.1} parent=39 // pred_check
          %p709 = pneg %p184
        $region46: #{tpu_custom_call.1} parent=39 // pred_check_branch
          %711 = sbr.rel (%p709) target = $region48
        $region47: #{tpu_custom_call.1} parent=39 // pred_region
          %s713 = ssub.s32 128, 128
          %714 = vsyncadd %s687, %s713
          %s715 = smul.addr %s25, 128
          %s716 = scalar_lea.hbm %s6, %s715
          %s718 = sshll.u32 %s690, 4
          %s719 = int_to_ptr.vmem [resolvable:$true] %s718
          %721 = dma.vmem_to_hbm [thread:$0]  %s719, 128, %s716, %s687
        $region48: #{tpu_custom_call.1} parent=39 // pred_fallthru
          _
        // Predicated region
        $region49: #{tpu_custom_call.1} parent=39 // pred_check
          %p722 = pneg %p210
        $region50: #{tpu_custom_call.1} parent=39 // pred_check_branch
          %724 = sbr.rel (%p722) target = $region52
        $region51: #{tpu_custom_call.1} parent=39 // pred_region
          %s726 = ssub.s32 64, 64
          %727 = vsyncadd %s692, %s726
          %s728 = smul.addr %s25, 64
          %s729 = scalar_lea.hbm %s7, %s728
          %s731 = sshll.u32 %s695, 4
          %s732 = int_to_ptr.vmem [resolvable:$true] %s731
          %734 = dma.vmem_to_hbm [thread:$0]  %s732, 64, %s729, %s692
        $region52: #{tpu_custom_call.1} parent=39 // pred_fallthru
          _
      $region40: #{tpu_custom_call.1} parent=5 // pred_fallthru
        _
      %p735 = scmp.le.s32.totalorder 2, %s20
      // Predicated region
      $region53: #{tpu_custom_call.1} parent=5 // pred_check
        %p736 = pneg %p735
      $region54: #{tpu_custom_call.1} parent=5 // pred_check_branch
        %738 = sbr.rel (%p736) target = $region56
      $region55: #{tpu_custom_call.1} parent=5 // pred_region
        %s739 = ssub.s32 %s20, 2
        // Predicated region
        $region57: #{tpu_custom_call.1} parent=55 // pred_check
          %p740 = pneg %p164
        $region58: #{tpu_custom_call.1} parent=55 // pred_check_branch
          %742 = sbr.rel (%p740) target = $region60
        $region59: #{tpu_custom_call.1} parent=55 // pred_region
          %s743 = sand.u32 %s149, 1
          %s744 = scalar_lea.sflag [#allocation3], %s743
          %s745 = sand.u32 %s149, 1
          %s746 = smul.addr %s745, 4
          %s747 = scalar_lea.vmem [#allocation2], %s746
          %748 = dma.done %s744, 64
        $region60: #{tpu_custom_call.1} parent=55 // pred_fallthru
          _
        // Predicated region
        $region61: #{tpu_custom_call.1} parent=55 // pred_check
          %p749 = pneg %p190
        $region62: #{tpu_custom_call.1} parent=55 // pred_check_branch
          %751 = sbr.rel (%p749) target = $region64
        $region63: #{tpu_custom_call.1} parent=55 // pred_region
          %s752 = sand.u32 %s26, 1
          %s753 = scalar_lea.sflag [#allocation5], %s752
          %s754 = sand.u32 %s175, 1
          %s755 = smul.addr %s754, 8
          %s756 = scalar_lea.vmem [#allocation4], %s755
          %757 = dma.done %s753, 128
        $region64: #{tpu_custom_call.1} parent=55 // pred_fallthru
          _
        // Predicated region
        $region65: #{tpu_custom_call.1} parent=55 // pred_check
          %p758 = pneg %p216
        $region66: #{tpu_custom_call.1} parent=55 // pred_check_branch
          %760 = sbr.rel (%p758) target = $region68
        $region67: #{tpu_custom_call.1} parent=55 // pred_region
          %s761 = sand.u32 %s26, 1
          %s762 = scalar_lea.sflag [#allocation5], %s761
          %s763 = sand.u32 %s201, 1
          %s764 = smul.addr %s763, 4
          %s765 = scalar_lea.vmem [#allocation6], %s764
          %766 = dma.done %s762, 64
        $region68: #{tpu_custom_call.1} parent=55 // pred_fallthru
          _
      $region56: #{tpu_custom_call.1} parent=5 // pred_fallthru
        _
    $region6: #{tpu_custom_call.1} parent=1 // loop_footer
      %s24 = sadd.s32 1, %s20
    $region7: #{tpu_custom_call.1} parent=1 // loop_footer_branch
      %19 = sbr.rel target = $region3
    $region8: #{tpu_custom_call.1} parent=1 // loop_exit
      _
    %767 = vsyncpa [#allocation3], 1
    %s768 = scalar_lea.sflag [#allocation3], 1
    %769 = vsyncpa %s768, 1
    %770 = vsyncpa [#allocation5], 1
    %s771 = scalar_lea.sflag [#allocation5], 1
    %772 = vsyncpa %s771, 1

</llo_original>
